<compile_context>
chip_gen: v7x
topology: tpu7x:2x2x1
jax: 0.10.0
libtpu: 0.0.40
codegen_flags: <defaults>
</compile_context>

<pallas_src>
import math

import jax
import jax.numpy as jnp
from jax.experimental import pallas as pl
from jax.experimental.pallas import tpu as pltpu


# ----------------------------- kernels -------------------------------------


def _affine_masked_kernel(x_ref, m_ref, ab_ref, o_ref):
    alpha = ab_ref[0]          # f32 scalars from SMEM (runtime, no recompile)
    beta = ab_ref[1]
    x = x_ref[...]
    m = m_ref[...]
    if m.dtype != jnp.bool_:   # compile-time branch; bool masks used directly
        m = m != 0
    y = alpha * x + beta       # f32 compute (matches torch float buffers)
    o_ref[...] = jnp.where(m, y, x).astype(o_ref.dtype)


def _affine_kernel(x_ref, ab_ref, o_ref):
    # mask=None specialization: pure affine map, no mask HBM traffic at all.
    alpha = ab_ref[0]
    beta = ab_ref[1]
    o_ref[...] = (alpha * x_ref[...] + beta).astype(o_ref.dtype)


# --------------------------- layout selection -------------------------------


def _tile_rows(rows, lanes, itemsize, sub):
    """Row tile: sublane-aligned, ~4 MiB per input tile, >=2 grid steps, and
    (when cheap) dividing `rows` so every store stays unmasked."""
    if rows <= sub:
        return rows                                   # single full-rows block (legal)
    tile_bytes = 4 * 1024 * 1024
    by_bytes = max(sub, (tile_bytes // (lanes * itemsize)) // sub * sub)
    half = -(-rows // 2)                              # guarantee >= 2 grid steps (v7x)
    half = max(sub, -(-half // sub) * sub)
    tile_rows = min(by_bytes, half)
    # Prefer a tile that divides rows (full-width DMA / unmasked vst on every step).
    t = tile_rows
    lo = max(sub, (tile_rows * 3) // 4)
    while t >= lo:
        if rows % t == 0:
            return t
        t -= sub
    return tile_rows


def _layout(shape, itemsize):
    """Return (lanes, rows, tile_rows, pad) for a free row-major reshape.

    pad == 0 in all but a pathological fallback, so the wrapper normally adds
    zero extra HBM passes around the pallas_call.
    """
    total = math.prod(shape)
    sub = max(8, 32 // itemsize)            # packed-sublane multiple: 8 f32, 16 bf16, 32 i8

    lanes = None
    if total % 128 == 0:
        # Lane-dense flatten: lanes a multiple of 128 -> unmasked full-width stores.
        for cand in (2048, 1024, 512, 256, 128):
            if total % cand == 0 and total // cand >= 2 * sub:
                lanes = cand
                break
        if lanes is None:
            for cand in (2048, 1024, 512, 256, 128):
                if total % cand == 0:
                    lanes = cand
                    break

    if lanes is None:
        # Ragged total: collapse trailing dims (still a free reshape) and use the
        # collapsed width as the (full-extent) lane dim -> no padding / slicing.
        cands, p = [], 1
        for d in reversed(shape):
            p *= d
            cands.append(p)
        fitting = [c for c in cands if c <= 2048]
        if fitting:
            lanes = max(fitting, key=lambda c: (c / (-(-c // 128) * 128), c))
        else:
            lanes = min(cands)
        if lanes * itemsize > 4 * 1024 * 1024:
            # Pathological shape (huge, non-128-multiple inner extent): fall back
            # to padding the flat view (extra HBM pass, correctness only).
            pad = (-total) % 128
            rows = (total + pad) // 128
            return 128, rows, _tile_rows(rows, 128, itemsize, sub), pad

    rows = total // lanes
    return lanes, rows, _tile_rows(rows, lanes, itemsize, sub), 0


# ------------------------------- wrapper ------------------------------------


def normalizer_forward(target, mask=None, *, affine=False, alpha=1.0, beta=0.0):
    """JAX/Pallas equivalent of Normalizer.forward (base-class semantics)."""
    assert target.ndim == 4, 'Normalizer expects 4 dim target tensor'
    if mask is not None:
        assert mask.ndim == 4, 'Normalizer expects 4 dim mask tensor'
        assert mask.shape == target.shape, 'mask must match target shape'

    # TODO(synk): normalize() raises NotImplementedError in the base class -> identity.
    if not affine:
        return target
    assert alpha > 0.0, 'Alpha cannot be zero'

    orig_shape = target.shape
    total = math.prod(orig_shape)
    itemsize = jnp.dtype(target.dtype).itemsize
    lanes, rows, tile_rows, pad = _layout(orig_shape, itemsize)

    x = target.reshape(-1)
    m = None if mask is None else mask.reshape(-1)
    if pad:  # only the pathological fallback path
        x = jnp.pad(x, (0, pad))
        if m is not None:
            m = jnp.pad(m, (0, pad))       # pads with False -> padded region untouched
    x2 = x.reshape(rows, lanes)
    m2 = None if m is None else m.reshape(rows, lanes)

    # alpha/beta as a runtime SMEM operand (no recompile per value pair).
    ab = jnp.asarray([alpha, beta], dtype=jnp.float32)

    data_block = pl.BlockSpec((tile_rows, lanes), lambda i: (i, 0))
    smem_spec = pl.BlockSpec(memory_space=pltpu.MemorySpace.SMEM)
    grid = (pl.cdiv(rows, tile_rows),)
    cparams = pltpu.CompilerParams(
        dimension_semantics=("parallel",),       # v7x: split the row loop across both TCs
        vmem_limit_bytes=40 * 1024 * 1024,       # 2x(x + mask + out) @ 4 MiB tiles << 40 MiB
    )

    if m2 is None:
        out2 = pl.pallas_call(
            _affine_kernel,
            out_shape=jax.ShapeDtypeStruct((rows, lanes), target.dtype),
            grid=grid,
            in_specs=[data_block, smem_spec],
            out_specs=data_block,
            compiler_params=cparams,
        )(x2, ab)
    else:
        out2 = pl.pallas_call(
            _affine_masked_kernel,
            out_shape=jax.ShapeDtypeStruct((rows, lanes), target.dtype),
            grid=grid,
            in_specs=[data_block, data_block, smem_spec],
            out_specs=data_block,
            compiler_params=cparams,
        )(x2, m2, ab)

    out = out2.reshape(-1)
    if pad:
        out = out[:total]
    return out.reshape(orig_shape)


# -------------------------------- test --------------------------------------


if __name__ == "__main__":
    key = jax.random.PRNGKey(0)
    k1, k2 = jax.random.split(key)

    N, C, H, W = 2, 4, 16, 16
    target = jax.random.normal(k1, (N, C, H, W), dtype=jnp.float32)
    mask = jax.random.uniform(k2, (N, C, H, W)) > 0.5        # bool, passed straight through

    alpha, beta = 2.0, 0.5  # deterministic buffer values (module __init__ args)

    # affine=True path (masked affine encode)
    out_affine = jax.block_until_ready(
        normalizer_forward(target, mask, affine=True, alpha=alpha, beta=beta))
    ref_affine = jnp.where(mask, alpha * target + beta, target)
    assert jnp.allclose(out_affine, ref_affine, atol=1e-6), "affine mismatch"

    # affine=False path (identity)
    out_id = jax.block_until_ready(normalizer_forward(target, mask, affine=False))
    assert jnp.allclose(out_id, target), "identity mismatch"

    # mask=None default (all-True mask) -> specialized no-mask kernel
    out_all = jax.block_until_ready(
        normalizer_forward(target, None, affine=True, alpha=alpha, beta=beta))
    assert jnp.allclose(out_all, alpha * target + beta, atol=1e-6), "all-mask mismatch"

    # non-128-multiple total exercises the ragged (pad-free) trailing-collapse path
    t2 = jax.random.normal(k1, (1, 3, 5, 7), dtype=jnp.float32)
    m2 = jax.random.uniform(k2, (1, 3, 5, 7)) > 0.5
    out_ragged = jax.block_until_ready(
        normalizer_forward(t2, m2, affine=True, alpha=alpha, beta=beta))
    assert jnp.allclose(out_ragged, jnp.where(m2, alpha * t2 + beta, t2),
                        atol=1e-6), "ragged mismatch"

    print("KERNEL_OK")
</pallas_src>

<mosaic_0001>
module attributes {stable_mosaic.version = 11 : i64} {
  func.func @_affine_masked_kernel(%arg0: i32, %arg1: memref<8x128xf32, #tpu.memory_space<vmem>>, %arg2: memref<8x128xi32, #tpu.memory_space<vmem>>, %arg3: memref<2xf32, #tpu.memory_space<smem>>, %arg4: memref<8x128xf32, #tpu.memory_space<vmem>>) attributes {dimension_semantics = [#tpu.dimension_semantics<parallel>], iteration_bounds = array<i64: 2>, scalar_prefetch = 0 : i64, scratch_operands = 0 : i64, tpu.core_type = #tpu.core_type<tc>, window_params = [{transform_indices = @transform_0, window_bounds = array<i64: 8, 128>}, {transform_indices = @transform_1, window_bounds = array<i64: 8, 128>}, {transform_indices = @transform_2, window_bounds = array<i64: 2>}, {transform_indices = @transform_3, window_bounds = array<i64: 8, 128>}]} {
    %c0 = arith.constant 0 : index
    %0 = memref.load %arg3[%c0] : memref<2xf32, #tpu.memory_space<smem>>
    %c1 = arith.constant 1 : index
    %1 = memref.load %arg3[%c1] : memref<2xf32, #tpu.memory_space<smem>>
    %c0_0 = arith.constant 0 : index
    %c0_1 = arith.constant 0 : index
    %2 = vector.load %arg1[%c0_0, %c0_1] : memref<8x128xf32, #tpu.memory_space<vmem>>, vector<8x128xf32>
    %c0_2 = arith.constant 0 : index
    %c0_3 = arith.constant 0 : index
    %3 = vector.load %arg2[%c0_2, %c0_3] : memref<8x128xi32, #tpu.memory_space<vmem>>, vector<8x128xi32>
    %cst = arith.constant dense<0> : vector<8x128xi32>
    %4 = arith.cmpi ne, %3, %cst : vector<8x128xi32>
    %5 = vector.broadcast %0 : f32 to vector<8x128xf32>
    %6 = arith.mulf %5, %2 : vector<8x128xf32>
    %7 = vector.broadcast %1 : f32 to vector<8x128xf32>
    %8 = arith.addf %6, %7 : vector<8x128xf32>
    %9 = arith.select %4, %8, %2 : vector<8x128xi1>, vector<8x128xf32>
    %c0_4 = arith.constant 0 : index
    %c0_5 = arith.constant 0 : index
    %10 = vector.load %arg4[%c0_4, %c0_5] : memref<8x128xf32, #tpu.memory_space<vmem>>, vector<8x128xf32>
    tpu.vector_store %arg4[%c0_4, %c0_5], %9 {strides = array<i32>} : memref<8x128xf32, #tpu.memory_space<vmem>>, vector<8x128xf32>,
    return
  }
  func.func @transform_0(%arg0: i32) -> (i32, i32) {
    %c0_i32 = arith.constant 0 : i32
    %c0_i32_0 = arith.constant 0 : i32
    return %arg0, %c0_i32 : i32, i32
  }
  func.func @transform_1(%arg0: i32) -> (i32, i32) {
    %c0_i32 = arith.constant 0 : i32
    %c0_i32_0 = arith.constant 0 : i32
    return %arg0, %c0_i32 : i32, i32
  }
  func.func @transform_2(%arg0: i32) -> i32 {
    %c0_i32 = arith.constant 0 : i32
    %c0_i32_0 = arith.constant 0 : i32
    return %c0_i32 : i32
  }
  func.func @transform_3(%arg0: i32) -> (i32, i32) {
    %c0_i32 = arith.constant 0 : i32
    %c0_i32_0 = arith.constant 0 : i32
    return %arg0, %c0_i32 : i32, i32
  }
}

</mosaic_0001>

<llo_original>
// kernel: tpu_custom_call.1
$region0: #{tpu_custom_call.1}
  #allocation0 [shape = 'u32[]', space=smem, size = 0x4, offset = 0x4, fixed_abs, tag = 'smem constant byte address 0x4 - core index']
  #allocation1 [shape = 'u32[144,128]{1,0:T(1,128)}', space=vmem, size = 0x12000, scoped, tag = 'internal scratch']
  %s0 = inlined_call_operand.vmem [shape: f32[16,128], index: 0, kind: input, shape index: {}]
  %s1 = inlined_call_operand.vmem [shape: s32[16,128], index: 1, kind: input, shape index: {}]
  %s2 = inlined_call_operand.vmem [shape: f32[2], index: 2, kind: input, shape index: {}]
  %s3 = inlined_call_operand.hbm [shape: f32[16,128], index: 3, kind: output, shape index: {}]
  %s4 = sld [smem:[#allocation0]]
  $region49: #{tpu_custom_call.1} parent=0
    _
  %s6 = ssub.s32 1, %s4
  %s7 = scalar_select 0, %s6, %s4
  $region1: #{tpu_custom_call.1} parent=0
    #allocation2 [shape = 'u8[512]{0}', space=smem, size = 0x200, scoped, tag = 'input window, operand 2, single buffered']
    #allocation3 [shape = 's32[2]{0}', space=sflag, size = 0x8, scoped, tag = 'scoped memory for tpu_custom_call.1']
    #allocation4 [shape = 's32[2]{0}', space=sflag, size = 0x8, scoped, tag = 'scoped memory for tpu_custom_call.1']
    #allocation5 [shape = 'u8[8192]{0}', space=vmem, size = 0x2000, scoped, tag = 'output window, operand 0']
    %8 = vsyncpa [#allocation4], 0
    %9 = vsyncpa [#allocation3], 0
    %s10 = scalar_lea.sflag [#allocation3], 1
    %11 = vsyncpa %s10, 0
    loop: start=0, step=1, limit=4
    $region2: #{tpu_custom_call.1} parent=1 // loop_pre_header
      _
    $region3: #{tpu_custom_call.1} parent=1 // loop_header
      %s13 = sphi 0, %s17
      %p14 = scmp.ge.s32.totalorder %s13, 4
      %s23 = sphi 0, %s25
      %s26 = sphi 0, %s23
      %s27 = sphi 0, %s26
      %s43 = sphi 0, %s27
      %s49 = sphi 0, %s51
      %s52 = sphi 0, %s49
      %s53 = sphi 0, %s52
      %s69 = sphi 0, %s53
      %s73 = sphi 0, %s73
      %s75 = sphi 0, %s73
      %s76 = sphi 0, %s75
      %s90 = sphi 0, %s76
      %s96 = sphi 0, %s98
      %s99 = sphi 0, %s96
      %s100 = sphi 0, %s99
      %s116 = sphi 0, %s100
    $region4: #{tpu_custom_call.1} parent=1 // loop_header_branch
      %16 = sbr.rel (%p14) target = $region8
    $region5: #{tpu_custom_call.1} parent=1 // loop_body
      %s18 = ssub.s32 %s13, 1
      %s19 = ssub.s32 %s13, 2
      %s20 = sadd.s32 %s13, 1
      %s21 = ssub.s32 %s13, %s20
      %p22 = scmp.eq.s32.totalorder %s21, 0
      %s24 = sadd.s32 %s23, 1
      %s25 = scalar_select %p22, %s23, %s24
      %p28 = pneg %p22
      %p29 = scmp.eq.s32.totalorder %s13, 1
      %p30 = por %p28, %p29
      %p31 = scmp.ne.s32.totalorder %s23, %s26
      %p32 = scmp.eq.s32.totalorder %s13, 0
      %p33 = por %p31, %p32
      %p34 = scmp.ne.s32.totalorder %s23, %s26
      %p35 = scmp.eq.s32.totalorder %s18, 1
      %p36 = por %p34, %p35
      %p37 = scmp.ne.s32.totalorder %s26, %s27
      %p38 = scmp.eq.s32.totalorder %s18, 0
      %p39 = por %p37, %p38
      %p40 = scmp.ne.s32.totalorder %s26, %s27
      %p41 = scmp.eq.s32.totalorder %s19, 1
      %p42 = por %p40, %p41
      %p44 = scmp.ne.s32.totalorder %s27, %s43
      %p45 = scmp.eq.s32.totalorder %s19, 0
      %p46 = por %p44, %p45
      %s47 = ssub.s32 %s13, %s20
      %p48 = scmp.eq.s32.totalorder %s47, 0
      %s50 = sadd.s32 %s49, 1
      %s51 = scalar_select %p48, %s49, %s50
      %p54 = pneg %p48
      %p55 = scmp.eq.s32.totalorder %s13, 1
      %p56 = por %p54, %p55
      %p57 = scmp.ne.s32.totalorder %s49, %s52
      %p58 = scmp.eq.s32.totalorder %s13, 0
      %p59 = por %p57, %p58
      %p60 = scmp.ne.s32.totalorder %s49, %s52
      %p61 = scmp.eq.s32.totalorder %s18, 1
      %p62 = por %p60, %p61
      %p63 = scmp.ne.s32.totalorder %s52, %s53
      %p64 = scmp.eq.s32.totalorder %s18, 0
      %p65 = por %p63, %p64
      %p66 = scmp.ne.s32.totalorder %s52, %s53
      %p67 = scmp.eq.s32.totalorder %s19, 1
      %p68 = por %p66, %p67
      %p70 = scmp.ne.s32.totalorder %s53, %s69
      %p71 = scmp.eq.s32.totalorder %s19, 0
      %p72 = por %p70, %p71
      %s74 = sadd.s32 %s73, 1
      %p77 = scmp.eq.s32.totalorder %s13, 1
      %p78 = scmp.ne.s32.totalorder %s73, %s75
      %p79 = scmp.eq.s32.totalorder %s13, 0
      %p80 = por %p78, %p79
      %p81 = scmp.ne.s32.totalorder %s73, %s75
      %p82 = scmp.eq.s32.totalorder %s18, 1
      %p83 = por %p81, %p82
      %p84 = scmp.ne.s32.totalorder %s75, %s76
      %p85 = scmp.eq.s32.totalorder %s18, 0
      %p86 = por %p84, %p85
      %p87 = scmp.ne.s32.totalorder %s75, %s76
      %p88 = scmp.eq.s32.totalorder %s19, 1
      %p89 = por %p87, %p88
      %p91 = scmp.ne.s32.totalorder %s76, %s90
      %p92 = scmp.eq.s32.totalorder %s19, 0
      %p93 = por %p91, %p92
      %s94 = ssub.s32 %s13, %s20
      %p95 = scmp.eq.s32.totalorder %s94, 0
      %s97 = sadd.s32 %s96, 1
      %s98 = scalar_select %p95, %s96, %s97
      %p101 = pneg %p95
      %p102 = scmp.eq.s32.totalorder %s13, 1
      %p103 = por %p101, %p102
      %p104 = scmp.ne.s32.totalorder %s96, %s99
      %p105 = scmp.eq.s32.totalorder %s13, 0
      %p106 = por %p104, %p105
      %p107 = scmp.ne.s32.totalorder %s96, %s99
      %p108 = scmp.eq.s32.totalorder %s18, 1
      %p109 = por %p107, %p108
      %p110 = scmp.ne.s32.totalorder %s99, %s100
      %p111 = scmp.eq.s32.totalorder %s18, 0
      %p112 = por %p110, %p111
      %p113 = scmp.ne.s32.totalorder %s99, %s100
      %p114 = scmp.eq.s32.totalorder %s19, 1
      %p115 = por %p113, %p114
      %p117 = scmp.ne.s32.totalorder %s100, %s116
      %p118 = scmp.eq.s32.totalorder %s19, 0
      %p119 = por %p117, %p118
      %p120 = scmp.le.s32.totalorder 1, %s13
      %p121 = scmp.lt.s32.totalorder %s13, 3
      %p122 = pnand %p120, %p121
      %p123 = pneg %p122
      // Predicated region
      $region9: #{tpu_custom_call.1} parent=5 // pred_check
        _
      $region10: #{tpu_custom_call.1} parent=5 // pred_check_branch
        %125 = sbr.rel (%p122) target = $region12
      $region11: #{tpu_custom_call.1} parent=5 // pred_region
        %s126 = ssub.s32 %s13, 1
        // Predicated region
        $region13: #{tpu_custom_call.1} parent=11 // pred_check
          %p127 = pneg %p86
        $region14: #{tpu_custom_call.1} parent=11 // pred_check_branch
          %129 = sbr.rel (%p127) target = $region16
        $region15: #{tpu_custom_call.1} parent=11 // pred_region
          %s131 = ssub.s32 16, 16
          %132 = vsyncadd [#allocation4], %s131
          %s134 = sshll.u32 %s2, 4
          %s135 = int_to_ptr.vmem [resolvable:$true] %s134
          %137 = dma.vmem_to_smem %s135, 16, [#allocation2], [#allocation4]
        $region16: #{tpu_custom_call.1} parent=11 // pred_fallthru
          _
      $region12: #{tpu_custom_call.1} parent=5 // pred_fallthru
        _
      %p138 = scmp.lt.s32.totalorder %s13, 2
      // Predicated region
      $region17: #{tpu_custom_call.1} parent=5 // pred_check
        %p139 = pneg %p138
      $region18: #{tpu_custom_call.1} parent=5 // pred_check_branch
        %141 = sbr.rel (%p139) target = $region20
      $region19: #{tpu_custom_call.1} parent=5 // pred_region
        // Predicated region
        $region21: #{tpu_custom_call.1} parent=19 // pred_check
          %p142 = pneg %p33
        $region22: #{tpu_custom_call.1} parent=19 // pred_check_branch
          %144 = sbr.rel (%p142) target = $region24
        $region23: #{tpu_custom_call.1} parent=19 // pred_region
          %p145 = scmp.lt.s32.totalorder %s13, 1
          %s146 = scalar_select %p145, %s13, 1
          %s147 = smul.addr %s146, 8
          %s148 = scalar_lea.vmem %s0, %s147
        $region24: #{tpu_custom_call.1} parent=19 // pred_fallthru
          _
        // Predicated region
        $region25: #{tpu_custom_call.1} parent=19 // pred_check
          %p149 = pneg %p59
        $region26: #{tpu_custom_call.1} parent=19 // pred_check_branch
          %151 = sbr.rel (%p149) target = $region28
        $region27: #{tpu_custom_call.1} parent=19 // pred_region
          %p152 = scmp.lt.s32.totalorder %s13, 1
          %s153 = scalar_select %p152, %s13, 1
          %s154 = smul.addr %s153, 8
          %s155 = scalar_lea.vmem %s1, %s154
        $region28: #{tpu_custom_call.1} parent=19 // pred_fallthru
          _
      $region20: #{tpu_custom_call.1} parent=5 // pred_fallthru
        _
      %p156 = scmp.le.s32.totalorder 1, %s13
      %p157 = scmp.lt.s32.totalorder %s13, 3
      %p158 = pnand %p156, %p157
      %p159 = pneg %p158
      // Predicated region
      $region29: #{tpu_custom_call.1} parent=5 // pred_check
        _
      $region30: #{tpu_custom_call.1} parent=5 // pred_check_branch
        %161 = sbr.rel (%p158) target = $region32
      $region31: #{tpu_custom_call.1} parent=5 // pred_region
        %s162 = ssub.s32 %s13, 1
        // Predicated region
        $region33: #{tpu_custom_call.1} parent=31 // pred_check
          %p163 = pneg %p86
        $region34: #{tpu_custom_call.1} parent=31 // pred_check_branch
          %165 = sbr.rel (%p163) target = $region36
        $region35: #{tpu_custom_call.1} parent=31 // pred_region
          %166 = dma.done [#allocation4], 16
        $region36: #{tpu_custom_call.1} parent=31 // pred_fallthru
          _
        %167 = sfence
        %p168 = scmp.lt.s32.totalorder %s18, 1
        %s169 = scalar_select %p168, %s18, 1
        %s170 = smul.addr %s169, 8
        %s171 = scalar_lea.vmem %s0, %s170
        %p172 = pneg %p39
        %p173 = pneg %p36
        %p174 = scmp.lt.s32.totalorder %s18, 1
        %s175 = scalar_select %p174, %s18, 1
        %s176 = smul.addr %s175, 8
        %s177 = scalar_lea.vmem %s1, %s176
        %p178 = pneg %p65
        %p179 = pneg %p62
        %p180 = pneg %p86
        %p181 = pneg %p83
        %p182 = pneg %p112
        %p183 = pneg %p109
        %s184 = sand.u32 %s99, 1
        %s185 = scalar_lea.sflag [#allocation3], %s184
        %s186 = sand.u32 %s99, 1
        %s187 = smul.addr %s186, 8
        %s188 = scalar_lea.vmem [#allocation5], %s187
        %p189 = scmp.lt.s32.totalorder %s18, 1
        %s190 = scalar_select %p189, %s18, 1
        %s191 = smul.addr %s190, 8
        %s192 = scalar_lea.vmem %s0, %s191
        %p193 = scmp.lt.s32.totalorder %s18, 1
        %s194 = scalar_select %p193, %s18, 1
        %s195 = smul.addr %s194, 8
        %s196 = scalar_lea.vmem %s1, %s195
        %s197 = sld [smem:[#allocation2]]
        %s198 = sld [smem:[#allocation2 + $0x1]]
        %v199 = vld [vmem:[%s192] sm:$0xff]
        %v200 = vld [vmem:[%s196] sm:$0xff]
        %vm201 = vcmp.ne.s32.totalorder %v200, 0
        %v202 = vstv %s197
        %v203 = vmul.f32 %v202, %v199
        %v204 = vstv %s198
        %v205 = vadd.f32 %v203, %v204
        %v206 = vsel %vm201, %v205, %v199
        %207 = vst [vmem:[%s188] sm:$0xff] %v206
        %s208 = sand.u32 %s99, 1
        %s209 = scalar_lea.sflag [#allocation3], %s208
        %s210 = sand.u32 %s99, 1
        %s211 = smul.addr %s210, 8
        %s212 = scalar_lea.vmem [#allocation5], %s211
        // Predicated region
        $region37: #{tpu_custom_call.1} parent=31 // pred_check
          %p213 = pneg %p109
        $region38: #{tpu_custom_call.1} parent=31 // pred_check_branch
          %215 = sbr.rel (%p213) target = $region40
        $region39: #{tpu_custom_call.1} parent=31 // pred_region
          %s217 = ssub.s32 128, 128
          %218 = vsyncadd %s209, %s217
          %s219 = smul.addr %s18, 128
          %s220 = scalar_lea.hbm %s3, %s219
          %s222 = sshll.u32 %s212, 4
          %s223 = int_to_ptr.vmem [resolvable:$true] %s222
          %225 = dma.vmem_to_hbm [thread:$0]  %s223, 128, %s220, %s209
        $region40: #{tpu_custom_call.1} parent=31 // pred_fallthru
          _
      $region32: #{tpu_custom_call.1} parent=5 // pred_fallthru
        _
      %p226 = scmp.le.s32.totalorder 2, %s13
      // Predicated region
      $region41: #{tpu_custom_call.1} parent=5 // pred_check
        %p227 = pneg %p226
      $region42: #{tpu_custom_call.1} parent=5 // pred_check_branch
        %229 = sbr.rel (%p227) target = $region44
      $region43: #{tpu_custom_call.1} parent=5 // pred_region
        %s230 = ssub.s32 %s13, 2
        // Predicated region
        $region45: #{tpu_custom_call.1} parent=43 // pred_check
          %p231 = pneg %p115
        $region46: #{tpu_custom_call.1} parent=43 // pred_check_branch
          %233 = sbr.rel (%p231) target = $region48
        $region47: #{tpu_custom_call.1} parent=43 // pred_region
          %s234 = sand.u32 %s100, 1
          %s235 = scalar_lea.sflag [#allocation3], %s234
          %s236 = sand.u32 %s100, 1
          %s237 = smul.addr %s236, 8
          %s238 = scalar_lea.vmem [#allocation5], %s237
          %239 = dma.done %s235, 128
        $region48: #{tpu_custom_call.1} parent=43 // pred_fallthru
          _
      $region44: #{tpu_custom_call.1} parent=5 // pred_fallthru
        _
    $region6: #{tpu_custom_call.1} parent=1 // loop_footer
      %s17 = sadd.s32 1, %s13
    $region7: #{tpu_custom_call.1} parent=1 // loop_footer_branch
      %12 = sbr.rel target = $region3
    $region8: #{tpu_custom_call.1} parent=1 // loop_exit
      _
    %240 = vsyncpa [#allocation3], 1
    %s241 = scalar_lea.sflag [#allocation3], 1
    %242 = vsyncpa %s241, 1
    %243 = vsyncpa [#allocation4], 1
    %s244 = scalar_lea.sflag [#allocation4], 1
    %245 = vsyncpa %s244, 1

</llo_original>
